<compile_context>
chip_gen: v7x
topology: tpu7x:2x2x1
jax: 0.10.0
libtpu: 0.0.40
codegen_flags: <defaults>
</compile_context>

<pallas_src>
import jax
import jax.numpy as jnp
from jax.experimental import pallas as pl
from jax.experimental.pallas import tpu as pltpu

EPS = 1e-3  # nn.BatchNorm2d(eps=0.001)


def _round_up(x, m):
    return (x + m - 1) // m * m


def _pick_vmem_limit():
    """Scoped-VMEM budget: ~3/4 of physical (capped at 96 MiB on 128-MiB v5e/v6e,
    ~48 MiB on 64-MiB v7x); conservative 48 MiB fallback that is safe everywhere."""
    try:
        phys = int(pltpu.get_tpu_info().vmem_capacity_bytes)
        return min(phys * 3 // 4, 96 * 1024 * 1024)
    except Exception:
        return 48 * 1024 * 1024


def _pick_tile_m(M, K, Cp, vmem_limit, use_cache):
    """Size the M tile from the explicit double-buffer byte budget:
    2*TM*K*2 (bf16 patches) + 2*TM*Cp*2 (bf16 out) [+ 2*TM*Cp*2 cache] + weights."""
    per_row = 2 * K * 2 + 2 * Cp * 2 + (2 * Cp * 2 if use_cache else 0)
    fixed = 2 * K * Cp * 2 + 2 * 8 * Cp * 4 + (64 << 10)   # weight bufs, stats bufs, slack
    budget = int(vmem_limit * 0.8) - fixed
    tm = max(budget // max(per_row, 1), 8)
    tm = min(tm, 1024, _round_up(M, 8))
    tm = max((tm // 8) * 8, 8)
    if M > 2 * tm:
        # Give each TensorCore >= 2 pipelined, balanced steps (matters on v7x megacore).
        tm = min(tm, _round_up(pl.cdiv(M, 4), 8))
    return tm


# ---------------- pass 1 kernels: matmul + per-channel sum / sumsq partials ----------------
def _conv_stats_kernel(p_ref, w_ref, s_ref):
    # p_ref: (TM, K) bf16; w_ref: (K, Cp) bf16; s_ref: (8, Cp) f32 partials (rows 0,1 used).
    acc = jnp.dot(p_ref[...], w_ref[...], preferred_element_type=jnp.float32)  # MXU, f32 acc
    s_ref[...] = jnp.zeros_like(s_ref)
    s_ref[0:1, :] = jnp.sum(acc, axis=0, keepdims=True)
    s_ref[1:2, :] = jnp.sum(acc * acc, axis=0, keepdims=True)


def _conv_stats_cache_kernel(p_ref, w_ref, s_ref, y_ref):
    # Same as above, but also caches the bf16 conv output so pass 2 skips the matmul.
    acc = jnp.dot(p_ref[...], w_ref[...], preferred_element_type=jnp.float32)
    y_ref[...] = acc.astype(y_ref.dtype)
    s_ref[...] = jnp.zeros_like(s_ref)
    s_ref[0:1, :] = jnp.sum(acc, axis=0, keepdims=True)
    s_ref[1:2, :] = jnp.sum(acc * acc, axis=0, keepdims=True)


# ---------------- pass 2 kernels: folded BN affine + ReLU ----------------
def _conv_bn_relu_kernel(p_ref, w_ref, ss_ref, o_ref):
    # Recompute path (K small): matmul again, then one broadcast FMA + ReLU in f32.
    acc = jnp.dot(p_ref[...], w_ref[...], preferred_element_type=jnp.float32)
    y = acc * ss_ref[0:1, :] + ss_ref[1:2, :]
    o_ref[...] = jnp.maximum(y, 0.0).astype(o_ref.dtype)


def _bn_relu_kernel(y_ref, ss_ref, o_ref):
    # Cache path (K large): pure elementwise load -> scale/shift -> ReLU.
    y = y_ref[...].astype(jnp.float32) * ss_ref[0:1, :] + ss_ref[1:2, :]
    o_ref[...] = jnp.maximum(y, 0.0).astype(o_ref.dtype)


def basic_conv2d_forward(x_nchw, weight, gamma, beta, *, stride, padding):
    """Conv2d(bias=False) -> BatchNorm2d (batch stats, eps=1e-3) -> ReLU.

    x_nchw: (N, Cin, H, W); weight: (Cout, Cin, kH, kW); gamma/beta: (Cout,).
    Returns bf16 NCHW output.
    """
    N, Cin, H, W = x_nchw.shape
    Cout, Cin_w, kH, kW = weight.shape
    assert Cin == Cin_w and kH == kW
    k = kH
    Ho = (H + 2 * padding - k) // stride + 1
    Wo = (W + 2 * padding - k) // stride + 1
    M = N * Ho * Wo
    K = Cin * k * k
    # Lane-dense output/weight lanes; K stays unpadded.  (For Cout > 128 on v6e one would
    # round Cp to 256 to keep the 256x256 MXU fully fed.)
    Cp = _round_up(Cout, 128)

    # im2col patch extraction as a single XLA op; K axis ordered (cin, kh, kw); bf16 MXU feed.
    x_nhwc = jnp.transpose(x_nchw, (0, 2, 3, 1)).astype(jnp.bfloat16)
    patches = jax.lax.conv_general_dilated_patches(
        x_nhwc, filter_shape=(k, k), window_strides=(stride, stride),
        padding=[(padding, padding), (padding, padding)],
        dimension_numbers=("NHWC", "HWIO", "NHWC"),
    )                                                   # (N, Ho, Wo, K) bf16
    P = patches.reshape(M, K)

    use_cache = K > 2 * Cp       # cache bf16 conv output iff cheaper than re-reading P
    vmem_limit = _pick_vmem_limit()
    TM = _pick_tile_m(M, K, Cp, vmem_limit, use_cache)
    Mp = _round_up(M, TM)
    if Mp > M:                   # zero rows do not perturb the batch statistics
        P = jnp.pad(P, ((0, Mp - M), (0, 0)))
    num_tiles = Mp // TM

    Wm = jnp.transpose(weight, (1, 2, 3, 0)).reshape(K, Cout)   # (cin,kh,kw) x cout
    if Cp > Cout:
        Wm = jnp.pad(Wm, ((0, 0), (0, Cp - Cout)))
    Wm = Wm.astype(jnp.bfloat16)

    cparams = pltpu.CompilerParams(
        dimension_semantics=("parallel",),      # M tiles split across TensorCores
        vmem_limit_bytes=vmem_limit,
    )
    # NOTE: on v7x, pipeline_mode=pl.Buffered(1) on the constant-index weight BlockSpec
    # would save one weight copy of VMEM; left at the default for portability.

    mm_flops = 2 * Mp * K * Cp
    p_bytes = Mp * K * 2
    w_bytes = K * Cp * 2

    stats_shape = jax.ShapeDtypeStruct((num_tiles * 8, Cp), jnp.float32)
    stats_spec = pl.BlockSpec((8, Cp), lambda i: (i, 0))
    p_spec = pl.BlockSpec((TM, K), lambda i: (i, 0))
    w_spec = pl.BlockSpec((K, Cp), lambda i: (0, 0))

    # ---- pass 1: conv matmul + per-tile partial channel sums (optionally cache conv) ----
    if use_cache:
        stats, conv_bf16 = pl.pallas_call(
            _conv_stats_cache_kernel,
            out_shape=(stats_shape, jax.ShapeDtypeStruct((Mp, Cp), jnp.bfloat16)),
            grid=(num_tiles,),
            in_specs=[p_spec, w_spec],
            out_specs=(stats_spec, pl.BlockSpec((TM, Cp), lambda i: (i, 0))),
            compiler_params=cparams,
            cost_estimate=pl.CostEstimate(
                flops=mm_flops, transcendentals=0,
                bytes_accessed=p_bytes + w_bytes + Mp * Cp * 2 + num_tiles * 8 * Cp * 4),
        )(P, Wm)
    else:
        stats = pl.pallas_call(
            _conv_stats_kernel,
            out_shape=stats_shape,
            grid=(num_tiles,),
            in_specs=[p_spec, w_spec],
            out_specs=stats_spec,
            compiler_params=cparams,
            cost_estimate=pl.CostEstimate(
                flops=mm_flops, transcendentals=0,
                bytes_accessed=p_bytes + w_bytes + num_tiles * 8 * Cp * 4),
        )(P, Wm)

    # Fold train-mode BatchNorm (biased variance over the real M rows) into (scale, shift).
    # NOTE: E[x^2] - E[x]^2 in f32 can cancel for channels with |mean| >> std; acceptable
    # at the tolerance used here (a centered second stats pass would be the safe fix).
    stats = stats.reshape(num_tiles, 8, Cp)
    tot_sum = jnp.sum(stats[:, 0, :], axis=0)
    tot_sq = jnp.sum(stats[:, 1, :], axis=0)
    mean = tot_sum / M
    var = jnp.maximum(tot_sq / M - mean * mean, 0.0)
    gamma_p = jnp.pad(gamma.astype(jnp.float32), (0, Cp - Cout))
    beta_p = jnp.pad(beta.astype(jnp.float32), (0, Cp - Cout))
    scale = gamma_p * jax.lax.rsqrt(var + EPS)
    shift = beta_p - mean * scale
    ss = jnp.stack([scale, shift], axis=0)              # (2, Cp) f32

    ss_spec = pl.BlockSpec((2, Cp), lambda i: (0, 0))
    o_spec = pl.BlockSpec((TM, Cp), lambda i: (i, 0))
    out_shape = jax.ShapeDtypeStruct((Mp, Cp), jnp.bfloat16)   # bf16 store: half the traffic

    # ---- pass 2: folded BN + ReLU (elementwise on the cache, or matmul recompute) ----
    if use_cache:
        out_flat = pl.pallas_call(
            _bn_relu_kernel,
            out_shape=out_shape,
            grid=(num_tiles,),
            in_specs=[pl.BlockSpec((TM, Cp), lambda i: (i, 0)), ss_spec],
            out_specs=o_spec,
            compiler_params=cparams,
            cost_estimate=pl.CostEstimate(
                flops=2 * Mp * Cp, transcendentals=0,
                bytes_accessed=2 * Mp * Cp * 2),
        )(conv_bf16, ss)
    else:
        out_flat = pl.pallas_call(
            _conv_bn_relu_kernel,
            out_shape=out_shape,
            grid=(num_tiles,),
            in_specs=[p_spec, w_spec, ss_spec],
            out_specs=o_spec,
            compiler_params=cparams,
            cost_estimate=pl.CostEstimate(
                flops=mm_flops + 2 * Mp * Cp, transcendentals=0,
                bytes_accessed=p_bytes + w_bytes + Mp * Cp * 2),
        )(P, Wm, ss)

    # Crop / reshape / transpose on bf16 (half the bytes of the old f32 epilogue).
    # For chaining into a following layer one would keep NHWC here.
    out = out_flat[:M, :Cout].reshape(N, Ho, Wo, Cout)
    return jnp.transpose(out, (0, 3, 1, 2))             # back to NCHW


def reference_forward(x_nchw, weight, gamma, beta, *, stride, padding):
    """Pure-JAX (XLA conv, f32) reference for checking."""
    out = jax.lax.conv_general_dilated(
        x_nchw.astype(jnp.float32), weight.astype(jnp.float32),
        window_strides=(stride, stride),
        padding=[(padding, padding), (padding, padding)],
        dimension_numbers=("NCHW", "OIHW", "NCHW"),
    )
    mean = out.mean(axis=(0, 2, 3), keepdims=True)
    var = ((out - mean) ** 2).mean(axis=(0, 2, 3), keepdims=True)
    y = (out - mean) * jax.lax.rsqrt(var + EPS) * gamma.reshape(1, -1, 1, 1) \
        + beta.reshape(1, -1, 1, 1)
    return jnp.maximum(y, 0.0)


if __name__ == "__main__":
    def run_case(N, Cin, Cout, H, W, k, stride, padding, key):
        kx, kw, kg, kb = jax.random.split(key, 4)
        x = jax.random.normal(kx, (N, Cin, H, W), dtype=jnp.float32)
        w = 0.1 * jax.random.normal(kw, (Cout, Cin, k, k), dtype=jnp.float32)
        gamma = 1.0 + 0.1 * jax.random.normal(kg, (Cout,), dtype=jnp.float32)
        beta = 0.1 * jax.random.normal(kb, (Cout,), dtype=jnp.float32)

        out = basic_conv2d_forward(x, w, gamma, beta, stride=stride, padding=padding)
        out = jax.block_until_ready(out)
        ref = reference_forward(x, w, gamma, beta, stride=stride, padding=padding)

        Ho = (H + 2 * padding - k) // stride + 1
        Wo = (W + 2 * padding - k) // stride + 1
        assert out.shape == (N, Cout, Ho, Wo)
        out_f32 = out.astype(jnp.float32)
        # bf16 MXU feed + bf16 output vs f32 reference (all BN math stays f32).
        assert jnp.allclose(out_f32, ref, atol=5e-2, rtol=5e-2), (
            f"mismatch: max abs err {jnp.max(jnp.abs(out_f32 - ref))}")

    key = jax.random.PRNGKey(0)
    k1, k2 = jax.random.split(key)
    # BasicConv2d(4, 8, kernel_size=3, stride=1, padding=1) on (2, 4, 16, 16): M=512.
    run_case(2, 4, 8, 16, 16, 3, 1, 1, k1)
    # Strided variant BasicConv2d(4, 16, kernel_size=3, stride=2, padding=1): M=128.
    run_case(2, 4, 16, 16, 16, 3, 2, 1, k2)

    print("KERNEL_OK")
</pallas_src>

<mosaic_0001>
module attributes {stable_mosaic.version = 11 : i64} {
  func.func @_conv_stats_kernel(%arg0: i32, %arg1: memref<512x36xbf16, #tpu.memory_space<vmem>>, %arg2: memref<36x128xbf16, #tpu.memory_space<vmem>>, %arg3: memref<8x128xf32, #tpu.memory_space<vmem>>) attributes {dimension_semantics = [#tpu.dimension_semantics<parallel>], iteration_bounds = array<i64: 1>, scalar_prefetch = 0 : i64, scratch_operands = 0 : i64, tpu.core_type = #tpu.core_type<tc>, window_params = [{transform_indices = @transform_0, window_bounds = array<i64: 512, 36>}, {pipeline_mode = #tpu.pipeline_mode<synchronous>, transform_indices = @transform_1, window_bounds = array<i64: 36, 128>}, {transform_indices = @transform_2, window_bounds = array<i64: 8, 128>}]} {
    %c0 = arith.constant 0 : index
    %c0_0 = arith.constant 0 : index
    %0 = vector.load %arg1[%c0, %c0_0] : memref<512x36xbf16, #tpu.memory_space<vmem>>, vector<512x36xbf16>
    %c0_1 = arith.constant 0 : index
    %c0_2 = arith.constant 0 : index
    %1 = vector.load %arg2[%c0_1, %c0_2] : memref<36x128xbf16, #tpu.memory_space<vmem>>, vector<36x128xbf16>
    %cst = arith.constant dense<0.000000e+00> : vector<512x128xf32>
    %2 = tpu.matmul %0, %1, %cst {dimension_numbers = #tpu.dot_dimension_numbers<[1], [0], [0], [1], [0, 0, 1, 1], [], []>} : vector<512x36xbf16>, vector<36x128xbf16>, vector<512x128xf32> -> vector<512x128xf32>
    %cst_3 = arith.constant 0.000000e+00 : f32
    %3 = vector.broadcast %cst_3 : f32 to vector<8x128xf32>
    %c0_4 = arith.constant 0 : index
    %c0_5 = arith.constant 0 : index
    %4 = vector.load %arg3[%c0_4, %c0_5] : memref<8x128xf32, #tpu.memory_space<vmem>>, vector<8x128xf32>
    tpu.vector_store %arg3[%c0_4, %c0_5], %3 {strides = array<i32>} : memref<8x128xf32, #tpu.memory_space<vmem>>, vector<8x128xf32>,
    %cst_6 = arith.constant dense<0.000000e+00> : vector<128xf32>
    %5 = vector.multi_reduction <add>, %2, %cst_6 [0] : vector<512x128xf32> to vector<128xf32>
    %6 = vector.shape_cast %5 : vector<128xf32> to vector<1x128xf32>
    %c0_7 = arith.constant 0 : index
    %c0_8 = arith.constant 0 : index
    %7 = vector.load %arg3[%c0_7, %c0_8] : memref<8x128xf32, #tpu.memory_space<vmem>>, vector<1x128xf32>
    tpu.vector_store %arg3[%c0_7, %c0_8], %6 {strides = array<i32>} : memref<8x128xf32, #tpu.memory_space<vmem>>, vector<1x128xf32>,
    %8 = arith.mulf %2, %2 : vector<512x128xf32>
    %cst_9 = arith.constant dense<0.000000e+00> : vector<128xf32>
    %9 = vector.multi_reduction <add>, %8, %cst_9 [0] : vector<512x128xf32> to vector<128xf32>
    %10 = vector.shape_cast %9 : vector<128xf32> to vector<1x128xf32>
    %c1 = arith.constant 1 : index
    %c0_10 = arith.constant 0 : index
    %11 = vector.load %arg3[%c1, %c0_10] : memref<8x128xf32, #tpu.memory_space<vmem>>, vector<1x128xf32>
    tpu.vector_store %arg3[%c1, %c0_10], %10 {strides = array<i32>} : memref<8x128xf32, #tpu.memory_space<vmem>>, vector<1x128xf32>,
    return
  }
  func.func @transform_0(%arg0: i32) -> (i32, i32) {
    %c0_i32 = arith.constant 0 : i32
    %c0_i32_0 = arith.constant 0 : i32
    return %arg0, %c0_i32 : i32, i32
  }
  func.func @transform_1(%arg0: i32) -> (i32, i32) {
    %c0_i32 = arith.constant 0 : i32
    %c0_i32_0 = arith.constant 0 : i32
    %c0_i32_1 = arith.constant 0 : i32
    return %c0_i32, %c0_i32_0 : i32, i32
  }
  func.func @transform_2(%arg0: i32) -> (i32, i32) {
    %c0_i32 = arith.constant 0 : i32
    %c0_i32_0 = arith.constant 0 : i32
    return %arg0, %c0_i32 : i32, i32
  }
}

</mosaic_0001>

<llo_original>
// kernel: tpu_custom_call.1
$region0: #{tpu_custom_call.1}
  #allocation0 [shape = 'u32[]', space=smem, size = 0x4, offset = 0x4, fixed_abs, tag = 'smem constant byte address 0x4 - core index']
  #allocation1 [shape = 'u32[144,128]{1,0:T(1,128)}', space=vmem, size = 0x12000, scoped, tag = 'internal scratch']
  %s0 = inlined_call_operand.vmem [shape: bf16[512,36], index: 0, kind: input, shape index: {}]
  %s1 = inlined_call_operand.vmem [shape: bf16[36,128], index: 1, kind: input, shape index: {}]
  %s2 = inlined_call_operand.hbm [shape: f32[8,128], index: 2, kind: output, shape index: {}]
  %s3 = sld [smem:[#allocation0]]
  $region18: #{tpu_custom_call.1} parent=0
    _
  %s5 = ssub.s32 1, %s3
  %s6 = scalar_select 0, %s5, %s3
  $region1: #{tpu_custom_call.1} parent=0
    #allocation2 [shape = 'u8[4096]{0}', space=vmem, size = 0x1000, scoped, tag = 'output window, operand 0, single buffered']
    #allocation3 [shape = 's32[1]{0}', space=sflag, size = 0x4, scoped, tag = 'scoped memory for tpu_custom_call.1']
    %7 = vsyncpa [#allocation3], 0
    // Predicated region
    $region2: #{tpu_custom_call.1} parent=1 // pred_check
      _
    $region3: #{tpu_custom_call.1} parent=1 // pred_check_branch
      %9 = sbr.rel (0) target = $region5
    $region4: #{tpu_custom_call.1} parent=1 // pred_region
      _
    $region5: #{tpu_custom_call.1} parent=1 // pred_fallthru
      _
    // Predicated region
    $region6: #{tpu_custom_call.1} parent=1 // pred_check
      _
    $region7: #{tpu_custom_call.1} parent=1 // pred_check_branch
      %11 = sbr.rel (0) target = $region9
    $region8: #{tpu_custom_call.1} parent=1 // pred_region
      _
    $region9: #{tpu_custom_call.1} parent=1 // pred_fallthru
      _
    %v13 = vld [vmem:[%s0] sm:$0xf]
    %v14 = vld [vmem:[%s0 + $0x4] sm:$0xf]
    %v15 = vld [vmem:[%s0 + $0x8] sm:$0xf]
    %v16 = vld [vmem:[%s0 + $0xc] sm:$0xf]
    %v17 = vld [vmem:[%s0 + $0x10] sm:$0xf]
    %v18 = vld [vmem:[%s0 + $0x14] sm:$0xf]
    %v19 = vld [vmem:[%s0 + $0x18] sm:$0xf]
    %v20 = vld [vmem:[%s0 + $0x1c] sm:$0xf]
    %v21 = vld [vmem:[%s0 + $0x20] sm:$0xf]
    %v22 = vld [vmem:[%s0 + $0x24] sm:$0xf]
    %v23 = vld [vmem:[%s0 + $0x28] sm:$0xf]
    %v24 = vld [vmem:[%s0 + $0x2c] sm:$0xf]
    %v25 = vld [vmem:[%s0 + $0x30] sm:$0xf]
    %v26 = vld [vmem:[%s0 + $0x34] sm:$0xf]
    %v27 = vld [vmem:[%s0 + $0x38] sm:$0xf]
    %v28 = vld [vmem:[%s0 + $0x3c] sm:$0xf]
    %v29 = vld [vmem:[%s0 + $0x40] sm:$0xf]
    %v30 = vld [vmem:[%s0 + $0x44] sm:$0xf]
    %v31 = vld [vmem:[%s0 + $0x48] sm:$0xf]
    %v32 = vld [vmem:[%s0 + $0x4c] sm:$0xf]
    %v33 = vld [vmem:[%s0 + $0x50] sm:$0xf]
    %v34 = vld [vmem:[%s0 + $0x54] sm:$0xf]
    %v35 = vld [vmem:[%s0 + $0x58] sm:$0xf]
    %v36 = vld [vmem:[%s0 + $0x5c] sm:$0xf]
    %v37 = vld [vmem:[%s0 + $0x60] sm:$0xf]
    %v38 = vld [vmem:[%s0 + $0x64] sm:$0xf]
    %v39 = vld [vmem:[%s0 + $0x68] sm:$0xf]
    %v40 = vld [vmem:[%s0 + $0x6c] sm:$0xf]
    %v41 = vld [vmem:[%s0 + $0x70] sm:$0xf]
    %v42 = vld [vmem:[%s0 + $0x74] sm:$0xf]
    %v43 = vld [vmem:[%s0 + $0x78] sm:$0xf]
    %v44 = vld [vmem:[%s0 + $0x7c] sm:$0xf]
    %v45 = vld [vmem:[%s0 + $0x80] sm:$0xf]
    %v46 = vld [vmem:[%s0 + $0x84] sm:$0xf]
    %v47 = vld [vmem:[%s0 + $0x88] sm:$0xf]
    %v48 = vld [vmem:[%s0 + $0x8c] sm:$0xf]
    %v49 = vld [vmem:[%s0 + $0x90] sm:$0xf]
    %v50 = vld [vmem:[%s0 + $0x94] sm:$0xf]
    %v51 = vld [vmem:[%s0 + $0x98] sm:$0xf]
    %v52 = vld [vmem:[%s0 + $0x9c] sm:$0xf]
    %v53 = vld [vmem:[%s0 + $0xa0] sm:$0xf]
    %v54 = vld [vmem:[%s0 + $0xa4] sm:$0xf]
    %v55 = vld [vmem:[%s0 + $0xa8] sm:$0xf]
    %v56 = vld [vmem:[%s0 + $0xac] sm:$0xf]
    %v57 = vld [vmem:[%s0 + $0xb0] sm:$0xf]
    %v58 = vld [vmem:[%s0 + $0xb4] sm:$0xf]
    %v59 = vld [vmem:[%s0 + $0xb8] sm:$0xf]
    %v60 = vld [vmem:[%s0 + $0xbc] sm:$0xf]
    %v61 = vld [vmem:[%s0 + $0xc0] sm:$0xf]
    %v62 = vld [vmem:[%s0 + $0xc4] sm:$0xf]
    %v63 = vld [vmem:[%s0 + $0xc8] sm:$0xf]
    %v64 = vld [vmem:[%s0 + $0xcc] sm:$0xf]
    %v65 = vld [vmem:[%s0 + $0xd0] sm:$0xf]
    %v66 = vld [vmem:[%s0 + $0xd4] sm:$0xf]
    %v67 = vld [vmem:[%s0 + $0xd8] sm:$0xf]
    %v68 = vld [vmem:[%s0 + $0xdc] sm:$0xf]
    %v69 = vld [vmem:[%s0 + $0xe0] sm:$0xf]
    %v70 = vld [vmem:[%s0 + $0xe4] sm:$0xf]
    %v71 = vld [vmem:[%s0 + $0xe8] sm:$0xf]
    %v72 = vld [vmem:[%s0 + $0xec] sm:$0xf]
    %v73 = vld [vmem:[%s0 + $0xf0] sm:$0xf]
    %v74 = vld [vmem:[%s0 + $0xf4] sm:$0xf]
    %v75 = vld [vmem:[%s0 + $0xf8] sm:$0xf]
    %v76 = vld [vmem:[%s0 + $0xfc] sm:$0xf]
    %v77 = vld [vmem:[%s1] sm:$0xf]
    %v78 = vld [vmem:[%s1 + $0x4] sm:$0xf]
    %v79 = vld [vmem:[%s1 + $0x8] sm:$0xf]
    %v80 = vld [vmem:[%s1 + $0xc] sm:$0xf]
    %v81 = vld [vmem:[%s1 + $0x10] sm:$0x3]
    %v146 = vunpack.c.l.b16 %v13
    %v147 = vunpack.c.l.b16 %v14
    %v148 = vunpack.c.l.b16 %v15
    %v149 = vunpack.c.l.b16 %v16
    %v150 = vunpack.c.l.b16 %v17
    %v151 = vunpack.c.l.b16 %v18
    %v152 = vunpack.c.l.b16 %v19
    %v153 = vunpack.c.l.b16 %v20
    %v154 = vunpack.c.l.b16 %v21
    %v155 = vunpack.c.l.b16 %v22
    %v156 = vunpack.c.l.b16 %v23
    %v157 = vunpack.c.l.b16 %v24
    %v158 = vunpack.c.l.b16 %v25
    %v159 = vunpack.c.l.b16 %v26
    %v160 = vunpack.c.l.b16 %v27
    %v161 = vunpack.c.l.b16 %v28
    %v162 = vunpack.c.l.b16 %v29
    %v163 = vunpack.c.l.b16 %v30
    %v164 = vunpack.c.l.b16 %v31
    %v165 = vunpack.c.l.b16 %v32
    %v166 = vunpack.c.l.b16 %v33
    %v167 = vunpack.c.l.b16 %v34
    %v168 = vunpack.c.l.b16 %v35
    %v169 = vunpack.c.l.b16 %v36
    %v170 = vunpack.c.l.b16 %v37
    %v171 = vunpack.c.l.b16 %v38
    %v172 = vunpack.c.l.b16 %v39
    %v173 = vunpack.c.l.b16 %v40
    %v174 = vunpack.c.l.b16 %v41
    %v175 = vunpack.c.l.b16 %v42
    %v176 = vunpack.c.l.b16 %v43
    %v177 = vunpack.c.l.b16 %v44
    %v178 = vunpack.c.l.b16 %v45
    %v179 = vunpack.c.l.b16 %v46
    %v180 = vunpack.c.l.b16 %v47
    %v181 = vunpack.c.l.b16 %v48
    %v182 = vunpack.c.l.b16 %v49
    %v183 = vunpack.c.l.b16 %v50
    %v184 = vunpack.c.l.b16 %v51
    %v185 = vunpack.c.l.b16 %v52
    %v186 = vunpack.c.l.b16 %v53
    %v187 = vunpack.c.l.b16 %v54
    %v188 = vunpack.c.l.b16 %v55
    %v189 = vunpack.c.l.b16 %v56
    %v190 = vunpack.c.l.b16 %v57
    %v191 = vunpack.c.l.b16 %v58
    %v192 = vunpack.c.l.b16 %v59
    %v193 = vunpack.c.l.b16 %v60
    %v194 = vunpack.c.l.b16 %v61
    %v195 = vunpack.c.l.b16 %v62
    %v196 = vunpack.c.l.b16 %v63
    %v197 = vunpack.c.l.b16 %v64
    %v198 = vunpack.c.l.b16 %v65
    %v199 = vunpack.c.l.b16 %v66
    %v200 = vunpack.c.l.b16 %v67
    %v201 = vunpack.c.l.b16 %v68
    %v202 = vunpack.c.l.b16 %v69
    %v203 = vunpack.c.l.b16 %v70
    %v204 = vunpack.c.l.b16 %v71
    %v205 = vunpack.c.l.b16 %v72
    %v206 = vunpack.c.l.b16 %v73
    %v207 = vunpack.c.l.b16 %v74
    %v208 = vunpack.c.l.b16 %v75
    %v209 = vunpack.c.l.b16 %v76
    %v210 = vpack.c.b16 %v147, %v146
    %v211 = vpack.c.b16 %v149, %v148
    %v212 = vpack.c.b16 %v151, %v150
    %v213 = vpack.c.b16 %v153, %v152
    %v214 = vpack.c.b16 %v155, %v154
    %v215 = vpack.c.b16 %v157, %v156
    %v216 = vpack.c.b16 %v159, %v158
    %v217 = vpack.c.b16 %v161, %v160
    %v218 = vpack.c.b16 %v163, %v162
    %v219 = vpack.c.b16 %v165, %v164
    %v220 = vpack.c.b16 %v167, %v166
    %v221 = vpack.c.b16 %v169, %v168
    %v222 = vpack.c.b16 %v171, %v170
    %v223 = vpack.c.b16 %v173, %v172
    %v224 = vpack.c.b16 %v175, %v174
    %v225 = vpack.c.b16 %v177, %v176
    %v226 = vpack.c.b16 %v179, %v178
    %v227 = vpack.c.b16 %v181, %v180
    %v228 = vpack.c.b16 %v183, %v182
    %v229 = vpack.c.b16 %v185, %v184
    %v230 = vpack.c.b16 %v187, %v186
    %v231 = vpack.c.b16 %v189, %v188
    %v232 = vpack.c.b16 %v191, %v190
    %v233 = vpack.c.b16 %v193, %v192
    %v234 = vpack.c.b16 %v195, %v194
    %v235 = vpack.c.b16 %v197, %v196
    %v236 = vpack.c.b16 %v199, %v198
    %v237 = vpack.c.b16 %v201, %v200
    %v238 = vpack.c.b16 %v203, %v202
    %v239 = vpack.c.b16 %v205, %v204
    %v240 = vpack.c.b16 %v207, %v206
    %v241 = vpack.c.b16 %v209, %v208
    %v247 = vunpack.c.l.b16 %v77
    %v248 = vunpack.c.l.b16 %v78
    %v249 = vunpack.c.l.b16 %v79
    %v250 = vunpack.c.l.b16 %v80
    %v251 = vunpack.c.l.b16 %v81
    %v252 = vpack.c.b16 %v248, %v247
    %v253 = vpack.c.b16 %v250, %v249
    %v254 = vpack.c.b16 %v251, %v251
    %vm257 = vcmask 293888
    %v259 = vsel %vm257, %v210, 0
    %v262 = vsel %vm257, %v211, 0
    %v265 = vsel %vm257, %v212, 0
    %v268 = vsel %vm257, %v213, 0
    %v271 = vsel %vm257, %v214, 0
    %v274 = vsel %vm257, %v215, 0
    %v277 = vsel %vm257, %v216, 0
    %v280 = vsel %vm257, %v217, 0
    %v283 = vsel %vm257, %v218, 0
    %v286 = vsel %vm257, %v219, 0
    %v289 = vsel %vm257, %v220, 0
    %v292 = vsel %vm257, %v221, 0
    %v295 = vsel %vm257, %v222, 0
    %v298 = vsel %vm257, %v223, 0
    %v301 = vsel %vm257, %v224, 0
    %v304 = vsel %vm257, %v225, 0
    %v307 = vsel %vm257, %v226, 0
    %v310 = vsel %vm257, %v227, 0
    %v313 = vsel %vm257, %v228, 0
    %v316 = vsel %vm257, %v229, 0
    %v319 = vsel %vm257, %v230, 0
    %v322 = vsel %vm257, %v231, 0
    %v325 = vsel %vm257, %v232, 0
    %v328 = vsel %vm257, %v233, 0
    %v331 = vsel %vm257, %v234, 0
    %v334 = vsel %vm257, %v235, 0
    %v337 = vsel %vm257, %v236, 0
    %v340 = vsel %vm257, %v237, 0
    %v343 = vsel %vm257, %v238, 0
    %v346 = vsel %vm257, %v239, 0
    %v349 = vsel %vm257, %v240, 0
    %v352 = vsel %vm257, %v241, 0
    %vm354 = vcmask 1041408
    %v356 = vsel %vm354, %v254, 0
    %358 = vmatprep.subr.bf16.mxu0 0
    %359 = vmatpush1.bf16.msra.mxu0 %v252
    %360 = vmatprep.subr.bf16.mxu0 0
    %361 = vmatpush1.bf16.msra.mxu0 %v253
    %362 = vmatprep.subr.bf16.mxu0 0
    %363 = vmatpush1.bf16.msra.mxu0 %v356
    %364 = vmatprep.subr.bf16.mxu0 0
    %365 = vmatpush1.bf16.msra.mxu0 0
    %366 = vmatprep.subr.bf16.mxu0 0
    %367 = vmatpush1.bf16.msra.mxu0 0
    %368 = vmatprep.subr.bf16.mxu0 0
    %369 = vmatpush1.bf16.msra.mxu0 0
    %370 = vmatprep.subr.bf16.mxu0 0
    %371 = vmatpush1.bf16.msra.mxu0 0
    %372 = vmatprep.subr.bf16.mxu0 0
    %373 = vmatpush1.bf16.msra.mxu0 0
    %374 = vmatprep.subr.bf16.mxu0 0
    %375 = vmatpush1.bf16.msra.mxu0 0
    %376 = vmatprep.subr.bf16.mxu0 0
    %377 = vmatpush1.bf16.msra.mxu0 0
    %378 = vmatprep.subr.bf16.mxu0 0
    %379 = vmatpush1.bf16.msra.mxu0 0
    %380 = vmatprep.subr.bf16.mxu0 0
    %381 = vmatpush1.bf16.msra.mxu0 0
    %382 = vmatprep.subr.bf16.mxu0 0
    %383 = vmatpush1.bf16.msra.mxu0 0
    %384 = vmatprep.subr.bf16.mxu0 0
    %385 = vmatpush1.bf16.msra.mxu0 0
    %386 = vmatprep.subr.bf16.mxu0 0
    %387 = vmatpush1.bf16.msra.mxu0 0
    %388 = vmatprep.subr.bf16.mxu0 0
    %389 = vmatpush1.bf16.msra.mxu0 0
    %390 = vmatprep.mubr.bf16.mxu0 0
    %391 = vmatmul.mubr.bf16.gmra.mrb[0].mxu0 %v259
    %v392 = vpop.f32.mrb[0].mxu0
    %v393 = vadd.f32 0.0, %v392
    %v394 = vpop.f32.mrb[0].mxu0
    %v395 = vpop.f32.mrb[0].mxu0
    %v396 = vadd.f32 0.0, %v395
    %v397 = vpop.f32.mrb[0].mxu0
    %398 = vmatprep.mubr.bf16.mxu0 0
    %399 = vmatmul.mubr.bf16.gmra.mrb[0].mxu0 %v262
    %v400 = vpop.f32.mrb[0].mxu0
    %v401 = vadd.f32 0.0, %v400
    %v402 = vpop.f32.mrb[0].mxu0
    %v403 = vpop.f32.mrb[0].mxu0
    %v404 = vadd.f32 0.0, %v403
    %v405 = vpop.f32.mrb[0].mxu0
    %406 = vmatprep.mubr.bf16.mxu0 0
    %407 = vmatmul.mubr.bf16.gmra.mrb[0].mxu0 %v265
    %v408 = vpop.f32.mrb[0].mxu0
    %v409 = vadd.f32 0.0, %v408
    %v410 = vpop.f32.mrb[0].mxu0
    %v411 = vpop.f32.mrb[0].mxu0
    %v412 = vadd.f32 0.0, %v411
    %v413 = vpop.f32.mrb[0].mxu0
    %414 = vmatprep.mubr.bf16.mxu0 0
    %415 = vmatmul.mubr.bf16.gmra.mrb[0].mxu0 %v268
    %v416 = vpop.f32.mrb[0].mxu0
    %v417 = vadd.f32 0.0, %v416
    %v418 = vpop.f32.mrb[0].mxu0
    %v419 = vpop.f32.mrb[0].mxu0
    %v420 = vadd.f32 0.0, %v419
    %v421 = vpop.f32.mrb[0].mxu0
    %422 = vmatprep.mubr.bf16.mxu0 0
    %423 = vmatmul.mubr.bf16.gmra.mrb[0].mxu0 %v271
    %v424 = vpop.f32.mrb[0].mxu0
    %v425 = vadd.f32 0.0, %v424
    %v426 = vpop.f32.mrb[0].mxu0
    %v427 = vpop.f32.mrb[0].mxu0
    %v428 = vadd.f32 0.0, %v427
    %v429 = vpop.f32.mrb[0].mxu0
    %430 = vmatprep.mubr.bf16.mxu0 0
    %431 = vmatmul.mubr.bf16.gmra.mrb[0].mxu0 %v274
    %v432 = vpop.f32.mrb[0].mxu0
    %v433 = vadd.f32 0.0, %v432
    %v434 = vpop.f32.mrb[0].mxu0
    %v435 = vpop.f32.mrb[0].mxu0
    %v436 = vadd.f32 0.0, %v435
    %v437 = vpop.f32.mrb[0].mxu0
    %438 = vmatprep.mubr.bf16.mxu0 0
    %439 = vmatmul.mubr.bf16.gmra.mrb[0].mxu0 %v277
    %v440 = vpop.f32.mrb[0].mxu0
    %v441 = vadd.f32 0.0, %v440
    %v442 = vpop.f32.mrb[0].mxu0
    %v443 = vpop.f32.mrb[0].mxu0
    %v444 = vadd.f32 0.0, %v443
    %v445 = vpop.f32.mrb[0].mxu0
    %446 = vmatprep.mubr.bf16.mxu0 0
    %447 = vmatmul.mubr.bf16.gmra.mrb[0].mxu0 %v280
    %v448 = vpop.f32.mrb[0].mxu0
    %v449 = vadd.f32 0.0, %v448
    %v450 = vpop.f32.mrb[0].mxu0
    %v451 = vpop.f32.mrb[0].mxu0
    %v452 = vadd.f32 0.0, %v451
    %v453 = vpop.f32.mrb[0].mxu0
    %454 = vmatprep.mubr.bf16.mxu0 0
    %455 = vmatmul.mubr.bf16.gmra.mrb[0].mxu0 %v283
    %v456 = vpop.f32.mrb[0].mxu0
    %v457 = vadd.f32 0.0, %v456
    %v458 = vpop.f32.mrb[0].mxu0
    %v459 = vpop.f32.mrb[0].mxu0
    %v460 = vadd.f32 0.0, %v459
    %v461 = vpop.f32.mrb[0].mxu0
    %462 = vmatprep.mubr.bf16.mxu0 0
    %463 = vmatmul.mubr.bf16.gmra.mrb[0].mxu0 %v286
    %v464 = vpop.f32.mrb[0].mxu0
    %v465 = vadd.f32 0.0, %v464
    %v466 = vpop.f32.mrb[0].mxu0
    %v467 = vpop.f32.mrb[0].mxu0
    %v468 = vadd.f32 0.0, %v467
    %v469 = vpop.f32.mrb[0].mxu0
    %470 = vmatprep.mubr.bf16.mxu0 0
    %471 = vmatmul.mubr.bf16.gmra.mrb[0].mxu0 %v289
    %v472 = vpop.f32.mrb[0].mxu0
    %v473 = vadd.f32 0.0, %v472
    %v474 = vpop.f32.mrb[0].mxu0
    %v475 = vpop.f32.mrb[0].mxu0
    %v476 = vadd.f32 0.0, %v475
    %v477 = vpop.f32.mrb[0].mxu0
    %478 = vmatprep.mubr.bf16.mxu0 0
    %479 = vmatmul.mubr.bf16.gmra.mrb[0].mxu0 %v292
    %v480 = vpop.f32.mrb[0].mxu0
    %v481 = vadd.f32 0.0, %v480
    %v482 = vpop.f32.mrb[0].mxu0
    %v483 = vpop.f32.mrb[0].mxu0
    %v484 = vadd.f32 0.0, %v483
    %v485 = vpop.f32.mrb[0].mxu0
    %486 = vmatprep.mubr.bf16.mxu0 0
    %487 = vmatmul.mubr.bf16.gmra.mrb[0].mxu0 %v295
    %v488 = vpop.f32.mrb[0].mxu0
    %v489 = vadd.f32 0.0, %v488
    %v490 = vpop.f32.mrb[0].mxu0
    %v491 = vpop.f32.mrb[0].mxu0
    %v492 = vadd.f32 0.0, %v491
    %v493 = vpop.f32.mrb[0].mxu0
    %494 = vmatprep.mubr.bf16.mxu0 0
    %495 = vmatmul.mubr.bf16.gmra.mrb[0].mxu0 %v298
    %v496 = vpop.f32.mrb[0].mxu0
    %v497 = vadd.f32 0.0, %v496
    %v498 = vpop.f32.mrb[0].mxu0
    %v499 = vpop.f32.mrb[0].mxu0
    %v500 = vadd.f32 0.0, %v499
    %v501 = vpop.f32.mrb[0].mxu0
    %502 = vmatprep.mubr.bf16.mxu0 0
    %503 = vmatmul.mubr.bf16.gmra.mrb[0].mxu0 %v301
    %v504 = vpop.f32.mrb[0].mxu0
    %v505 = vadd.f32 0.0, %v504
    %v506 = vpop.f32.mrb[0].mxu0
    %v507 = vpop.f32.mrb[0].mxu0
    %v508 = vadd.f32 0.0, %v507
    %v509 = vpop.f32.mrb[0].mxu0
    %510 = vmatprep.mubr.bf16.mxu0 0
    %511 = vmatmul.mubr.bf16.gmra.mrb[0].mxu0 %v304
    %v512 = vpop.f32.mrb[0].mxu0
    %v513 = vadd.f32 0.0, %v512
    %v514 = vpop.f32.mrb[0].mxu0
    %v515 = vpop.f32.mrb[0].mxu0
    %v516 = vadd.f32 0.0, %v515
    %v517 = vpop.f32.mrb[0].mxu0
    %518 = vmatprep.mubr.bf16.mxu0 0
    %519 = vmatmul.mubr.bf16.gmra.mrb[0].mxu0 %v307
    %v520 = vpop.f32.mrb[0].mxu0
    %v521 = vadd.f32 0.0, %v520
    %v522 = vpop.f32.mrb[0].mxu0
    %v523 = vpop.f32.mrb[0].mxu0
    %v524 = vadd.f32 0.0, %v523
    %v525 = vpop.f32.mrb[0].mxu0
    %526 = vmatprep.mubr.bf16.mxu0 0
    %527 = vmatmul.mubr.bf16.gmra.mrb[0].mxu0 %v310
    %v528 = vpop.f32.mrb[0].mxu0
    %v529 = vadd.f32 0.0, %v528
    %v530 = vpop.f32.mrb[0].mxu0
    %v531 = vpop.f32.mrb[0].mxu0
    %v532 = vadd.f32 0.0, %v531
    %v533 = vpop.f32.mrb[0].mxu0
    %534 = vmatprep.mubr.bf16.mxu0 0
    %535 = vmatmul.mubr.bf16.gmra.mrb[0].mxu0 %v313
    %v536 = vpop.f32.mrb[0].mxu0
    %v537 = vadd.f32 0.0, %v536
    %v538 = vpop.f32.mrb[0].mxu0
    %v539 = vpop.f32.mrb[0].mxu0
    %v540 = vadd.f32 0.0, %v539
    %v541 = vpop.f32.mrb[0].mxu0
    %542 = vmatprep.mubr.bf16.mxu0 0
    %543 = vmatmul.mubr.bf16.gmra.mrb[0].mxu0 %v316
    %v544 = vpop.f32.mrb[0].mxu0
    %v545 = vadd.f32 0.0, %v544
    %v546 = vpop.f32.mrb[0].mxu0
    %v547 = vpop.f32.mrb[0].mxu0
    %v548 = vadd.f32 0.0, %v547
    %v549 = vpop.f32.mrb[0].mxu0
    %550 = vmatprep.mubr.bf16.mxu0 0
    %551 = vmatmul.mubr.bf16.gmra.mrb[0].mxu0 %v319
    %v552 = vpop.f32.mrb[0].mxu0
    %v553 = vadd.f32 0.0, %v552
    %v554 = vpop.f32.mrb[0].mxu0
    %v555 = vpop.f32.mrb[0].mxu0
    %v556 = vadd.f32 0.0, %v555
    %v557 = vpop.f32.mrb[0].mxu0
    %558 = vmatprep.mubr.bf16.mxu0 0
    %559 = vmatmul.mubr.bf16.gmra.mrb[0].mxu0 %v322
    %v560 = vpop.f32.mrb[0].mxu0
    %v561 = vadd.f32 0.0, %v560
    %v562 = vpop.f32.mrb[0].mxu0
    %v563 = vpop.f32.mrb[0].mxu0
    %v564 = vadd.f32 0.0, %v563
    %v565 = vpop.f32.mrb[0].mxu0
    %566 = vmatprep.mubr.bf16.mxu0 0
    %567 = vmatmul.mubr.bf16.gmra.mrb[0].mxu0 %v325
    %v568 = vpop.f32.mrb[0].mxu0
    %v569 = vadd.f32 0.0, %v568
    %v570 = vpop.f32.mrb[0].mxu0
    %v571 = vpop.f32.mrb[0].mxu0
    %v572 = vadd.f32 0.0, %v571
    %v573 = vpop.f32.mrb[0].mxu0
    %574 = vmatprep.mubr.bf16.mxu0 0
    %575 = vmatmul.mubr.bf16.gmra.mrb[0].mxu0 %v328
    %v576 = vpop.f32.mrb[0].mxu0
    %v577 = vadd.f32 0.0, %v576
    %v578 = vpop.f32.mrb[0].mxu0
    %v579 = vpop.f32.mrb[0].mxu0
    %v580 = vadd.f32 0.0, %v579
    %v581 = vpop.f32.mrb[0].mxu0
    %582 = vmatprep.mubr.bf16.mxu0 0
    %583 = vmatmul.mubr.bf16.gmra.mrb[0].mxu0 %v331
    %v584 = vpop.f32.mrb[0].mxu0
    %v585 = vadd.f32 0.0, %v584
    %v586 = vpop.f32.mrb[0].mxu0
    %v587 = vpop.f32.mrb[0].mxu0
    %v588 = vadd.f32 0.0, %v587
    %v589 = vpop.f32.mrb[0].mxu0
    %590 = vmatprep.mubr.bf16.mxu0 0
    %591 = vmatmul.mubr.bf16.gmra.mrb[0].mxu0 %v334
    %v592 = vpop.f32.mrb[0].mxu0
    %v593 = vadd.f32 0.0, %v592
    %v594 = vpop.f32.mrb[0].mxu0
    %v595 = vpop.f32.mrb[0].mxu0
    %v596 = vadd.f32 0.0, %v595
    %v597 = vpop.f32.mrb[0].mxu0
    %598 = vmatprep.mubr.bf16.mxu0 0
    %599 = vmatmul.mubr.bf16.gmra.mrb[0].mxu0 %v337
    %v600 = vpop.f32.mrb[0].mxu0
    %v601 = vadd.f32 0.0, %v600
    %v602 = vpop.f32.mrb[0].mxu0
    %v603 = vpop.f32.mrb[0].mxu0
    %v604 = vadd.f32 0.0, %v603
    %v605 = vpop.f32.mrb[0].mxu0
    %606 = vmatprep.mubr.bf16.mxu0 0
    %607 = vmatmul.mubr.bf16.gmra.mrb[0].mxu0 %v340
    %v608 = vpop.f32.mrb[0].mxu0
    %v609 = vadd.f32 0.0, %v608
    %v610 = vpop.f32.mrb[0].mxu0
    %v611 = vpop.f32.mrb[0].mxu0
    %v612 = vadd.f32 0.0, %v611
    %v613 = vpop.f32.mrb[0].mxu0
    %614 = vmatprep.mubr.bf16.mxu0 0
    %615 = vmatmul.mubr.bf16.gmra.mrb[0].mxu0 %v343
    %v616 = vpop.f32.mrb[0].mxu0
    %v617 = vadd.f32 0.0, %v616
    %v618 = vpop.f32.mrb[0].mxu0
    %v619 = vpop.f32.mrb[0].mxu0
    %v620 = vadd.f32 0.0, %v619
    %v621 = vpop.f32.mrb[0].mxu0
    %622 = vmatprep.mubr.bf16.mxu0 0
    %623 = vmatmul.mubr.bf16.gmra.mrb[0].mxu0 %v346
    %v624 = vpop.f32.mrb[0].mxu0
    %v625 = vadd.f32 0.0, %v624
    %v626 = vpop.f32.mrb[0].mxu0
    %v627 = vpop.f32.mrb[0].mxu0
    %v628 = vadd.f32 0.0, %v627
    %v629 = vpop.f32.mrb[0].mxu0
    %630 = vmatprep.mubr.bf16.mxu0 0
    %631 = vmatmul.mubr.bf16.gmra.mrb[0].mxu0 %v349
    %v632 = vpop.f32.mrb[0].mxu0
    %v633 = vadd.f32 0.0, %v632
    %v634 = vpop.f32.mrb[0].mxu0
    %v635 = vpop.f32.mrb[0].mxu0
    %v636 = vadd.f32 0.0, %v635
    %v637 = vpop.f32.mrb[0].mxu0
    %638 = vmatprep.mubr.bf16.mxu0 0
    %639 = vmatmul.mubr.bf16.gmra.mrb[0].mxu0 %v352
    %v640 = vpop.f32.mrb[0].mxu0
    %v641 = vadd.f32 0.0, %v640
    %v642 = vpop.f32.mrb[0].mxu0
    %v643 = vpop.f32.mrb[0].mxu0
    %v644 = vadd.f32 0.0, %v643
    %v645 = vpop.f32.mrb[0].mxu0
    %646 = vdwg.mxu0
    %647 = vst [vmem:[#allocation2] sm:$0xff] 0.0
    %v648 = vadd.f32 %v393, %v396
    %v649 = vadd.f32 %v648, %v401
    %v650 = vadd.f32 %v649, %v404
    %v651 = vadd.f32 %v650, %v409
    %v652 = vadd.f32 %v651, %v412
    %v653 = vadd.f32 %v652, %v417
    %v654 = vadd.f32 %v653, %v420
    %v655 = vadd.f32 %v654, %v425
    %v656 = vadd.f32 %v655, %v428
    %v657 = vadd.f32 %v656, %v433
    %v658 = vadd.f32 %v657, %v436
    %v659 = vadd.f32 %v658, %v441
    %v660 = vadd.f32 %v659, %v444
    %v661 = vadd.f32 %v660, %v449
    %v662 = vadd.f32 %v661, %v452
    %v663 = vadd.f32 %v662, %v457
    %v664 = vadd.f32 %v663, %v460
    %v665 = vadd.f32 %v664, %v465
    %v666 = vadd.f32 %v665, %v468
    %v667 = vadd.f32 %v666, %v473
    %v668 = vadd.f32 %v667, %v476
    %v669 = vadd.f32 %v668, %v481
    %v670 = vadd.f32 %v669, %v484
    %v671 = vadd.f32 %v670, %v489
    %v672 = vadd.f32 %v671, %v492
    %v673 = vadd.f32 %v672, %v497
    %v674 = vadd.f32 %v673, %v500
    %v675 = vadd.f32 %v674, %v505
    %v676 = vadd.f32 %v675, %v508
    %v677 = vadd.f32 %v676, %v513
    %v678 = vadd.f32 %v677, %v516
    %v679 = vadd.f32 %v678, %v521
    %v680 = vadd.f32 %v679, %v524
    %v681 = vadd.f32 %v680, %v529
    %v682 = vadd.f32 %v681, %v532
    %v683 = vadd.f32 %v682, %v537
    %v684 = vadd.f32 %v683, %v540
    %v685 = vadd.f32 %v684, %v545
    %v686 = vadd.f32 %v685, %v548
    %v687 = vadd.f32 %v686, %v553
    %v688 = vadd.f32 %v687, %v556
    %v689 = vadd.f32 %v688, %v561
    %v690 = vadd.f32 %v689, %v564
    %v691 = vadd.f32 %v690, %v569
    %v692 = vadd.f32 %v691, %v572
    %v693 = vadd.f32 %v692, %v577
    %v694 = vadd.f32 %v693, %v580
    %v695 = vadd.f32 %v694, %v585
    %v696 = vadd.f32 %v695, %v588
    %v697 = vadd.f32 %v696, %v593
    %v698 = vadd.f32 %v697, %v596
    %v699 = vadd.f32 %v698, %v601
    %v700 = vadd.f32 %v699, %v604
    %v701 = vadd.f32 %v700, %v609
    %v702 = vadd.f32 %v701, %v612
    %v703 = vadd.f32 %v702, %v617
    %v704 = vadd.f32 %v703, %v620
    %v705 = vadd.f32 %v704, %v625
    %v706 = vadd.f32 %v705, %v628
    %v707 = vadd.f32 %v706, %v633
    %v708 = vadd.f32 %v707, %v636
    %v709 = vadd.f32 %v708, %v641
    %v710 = vadd.f32 %v709, %v644
    %v711 = vrot.slane %v710, 4
    %v712 = vadd.f32 %v710, %v711
    %v713 = vrot.slane %v712, 2
    %v714 = vadd.f32 %v712, %v713
    %v715 = vrot.slane %v714, 1
    %v716 = vadd.f32 %v714, %v715
    %717 = vst [vmem:[#allocation2] sm:$0x1] %v716
    %v718 = vmul.f32 %v393, %v393
    %v719 = vmul.f32 %v396, %v396
    %v720 = vmul.f32 %v401, %v401
    %v721 = vmul.f32 %v404, %v404
    %v722 = vmul.f32 %v409, %v409
    %v723 = vmul.f32 %v412, %v412
    %v724 = vmul.f32 %v417, %v417
    %v725 = vmul.f32 %v420, %v420
    %v726 = vmul.f32 %v425, %v425
    %v727 = vmul.f32 %v428, %v428
    %v728 = vmul.f32 %v433, %v433
    %v729 = vmul.f32 %v436, %v436
    %v730 = vmul.f32 %v441, %v441
    %v731 = vmul.f32 %v444, %v444
    %v732 = vmul.f32 %v449, %v449
    %v733 = vmul.f32 %v452, %v452
    %v734 = vmul.f32 %v457, %v457
    %v735 = vmul.f32 %v460, %v460
    %v736 = vmul.f32 %v465, %v465
    %v737 = vmul.f32 %v468, %v468
    %v738 = vmul.f32 %v473, %v473
    %v739 = vmul.f32 %v476, %v476
    %v740 = vmul.f32 %v481, %v481
    %v741 = vmul.f32 %v484, %v484
    %v742 = vmul.f32 %v489, %v489
    %v743 = vmul.f32 %v492, %v492
    %v744 = vmul.f32 %v497, %v497
    %v745 = vmul.f32 %v500, %v500
    %v746 = vmul.f32 %v505, %v505
    %v747 = vmul.f32 %v508, %v508
    %v748 = vmul.f32 %v513, %v513
    %v749 = vmul.f32 %v516, %v516
    %v750 = vmul.f32 %v521, %v521
    %v751 = vmul.f32 %v524, %v524
    %v752 = vmul.f32 %v529, %v529
    %v753 = vmul.f32 %v532, %v532
    %v754 = vmul.f32 %v537, %v537
    %v755 = vmul.f32 %v540, %v540
    %v756 = vmul.f32 %v545, %v545
    %v757 = vmul.f32 %v548, %v548
    %v758 = vmul.f32 %v553, %v553
    %v759 = vmul.f32 %v556, %v556
    %v760 = vmul.f32 %v561, %v561
    %v761 = vmul.f32 %v564, %v564
    %v762 = vmul.f32 %v569, %v569
    %v763 = vmul.f32 %v572, %v572
    %v764 = vmul.f32 %v577, %v577
    %v765 = vmul.f32 %v580, %v580
    %v766 = vmul.f32 %v585, %v585
    %v767 = vmul.f32 %v588, %v588
    %v768 = vmul.f32 %v593, %v593
    %v769 = vmul.f32 %v596, %v596
    %v770 = vmul.f32 %v601, %v601
    %v771 = vmul.f32 %v604, %v604
    %v772 = vmul.f32 %v609, %v609
    %v773 = vmul.f32 %v612, %v612
    %v774 = vmul.f32 %v617, %v617
    %v775 = vmul.f32 %v620, %v620
    %v776 = vmul.f32 %v625, %v625
    %v777 = vmul.f32 %v628, %v628
    %v778 = vmul.f32 %v633, %v633
    %v779 = vmul.f32 %v636, %v636
    %v780 = vmul.f32 %v641, %v641
    %v781 = vmul.f32 %v644, %v644
    %v782 = vadd.f32 %v718, %v719
    %v783 = vadd.f32 %v782, %v720
    %v784 = vadd.f32 %v783, %v721
    %v785 = vadd.f32 %v784, %v722
    %v786 = vadd.f32 %v785, %v723
    %v787 = vadd.f32 %v786, %v724
    %v788 = vadd.f32 %v787, %v725
    %v789 = vadd.f32 %v788, %v726
    %v790 = vadd.f32 %v789, %v727
    %v791 = vadd.f32 %v790, %v728
    %v792 = vadd.f32 %v791, %v729
    %v793 = vadd.f32 %v792, %v730
    %v794 = vadd.f32 %v793, %v731
    %v795 = vadd.f32 %v794, %v732
    %v796 = vadd.f32 %v795, %v733
    %v797 = vadd.f32 %v796, %v734
    %v798 = vadd.f32 %v797, %v735
    %v799 = vadd.f32 %v798, %v736
    %v800 = vadd.f32 %v799, %v737
    %v801 = vadd.f32 %v800, %v738
    %v802 = vadd.f32 %v801, %v739
    %v803 = vadd.f32 %v802, %v740
    %v804 = vadd.f32 %v803, %v741
    %v805 = vadd.f32 %v804, %v742
    %v806 = vadd.f32 %v805, %v743
    %v807 = vadd.f32 %v806, %v744
    %v808 = vadd.f32 %v807, %v745
    %v809 = vadd.f32 %v808, %v746
    %v810 = vadd.f32 %v809, %v747
    %v811 = vadd.f32 %v810, %v748
    %v812 = vadd.f32 %v811, %v749
    %v813 = vadd.f32 %v812, %v750
    %v814 = vadd.f32 %v813, %v751
    %v815 = vadd.f32 %v814, %v752
    %v816 = vadd.f32 %v815, %v753
    %v817 = vadd.f32 %v816, %v754
    %v818 = vadd.f32 %v817, %v755
    %v819 = vadd.f32 %v818, %v756
    %v820 = vadd.f32 %v819, %v757
    %v821 = vadd.f32 %v820, %v758
    %v822 = vadd.f32 %v821, %v759
    %v823 = vadd.f32 %v822, %v760
    %v824 = vadd.f32 %v823, %v761
    %v825 = vadd.f32 %v824, %v762
    %v826 = vadd.f32 %v825, %v763
    %v827 = vadd.f32 %v826, %v764
    %v828 = vadd.f32 %v827, %v765
    %v829 = vadd.f32 %v828, %v766
    %v830 = vadd.f32 %v829, %v767
    %v831 = vadd.f32 %v830, %v768
    %v832 = vadd.f32 %v831, %v769
    %v833 = vadd.f32 %v832, %v770
    %v834 = vadd.f32 %v833, %v771
    %v835 = vadd.f32 %v834, %v772
    %v836 = vadd.f32 %v835, %v773
    %v837 = vadd.f32 %v836, %v774
    %v838 = vadd.f32 %v837, %v775
    %v839 = vadd.f32 %v838, %v776
    %v840 = vadd.f32 %v839, %v777
    %v841 = vadd.f32 %v840, %v778
    %v842 = vadd.f32 %v841, %v779
    %v843 = vadd.f32 %v842, %v780
    %v844 = vadd.f32 %v843, %v781
    %v845 = vrot.slane %v844, 4
    %v846 = vadd.f32 %v844, %v845
    %v847 = vrot.slane %v846, 2
    %v848 = vadd.f32 %v846, %v847
    %v849 = vrot.slane %v848, 1
    %v850 = vadd.f32 %v848, %v849
    %851 = vst [vmem:[#allocation2 + $0x1] sm:$0x1] %v850
    // Predicated region
    $region10: #{tpu_custom_call.1} parent=1 // pred_check
      _
    $region11: #{tpu_custom_call.1} parent=1 // pred_check_branch
      %853 = sbr.rel (0) target = $region13
    $region12: #{tpu_custom_call.1} parent=1 // pred_region
      %s855 = ssub.s32 128, 128
      %856 = vsyncadd [#allocation3], %s855
      %s858 = sshll.u32 [#allocation2], 4
      %s859 = int_to_ptr.vmem [resolvable:$true] %s858
      %861 = dma.vmem_to_hbm [thread:$0]  %s859, 128, %s2, [#allocation3]
    $region13: #{tpu_custom_call.1} parent=1 // pred_fallthru
      _
    // Predicated region
    $region14: #{tpu_custom_call.1} parent=1 // pred_check
      _
    $region15: #{tpu_custom_call.1} parent=1 // pred_check_branch
      %863 = sbr.rel (0) target = $region17
    $region16: #{tpu_custom_call.1} parent=1 // pred_region
      %864 = dma.done [#allocation3], 128
    $region17: #{tpu_custom_call.1} parent=1 // pred_fallthru
      _
    %865 = vsyncpa [#allocation3], 1

</llo_original>
